<compile_context>
chip_gen: v6e
topology: v6e:2x2x1
jax: 0.10.0
libtpu: 0.0.40
codegen_flags: <defaults>
</compile_context>

<pallas_src>
import functools
import math

import jax
import jax.numpy as jnp
from jax.experimental import pallas as pl
from jax.experimental.pallas import tpu as pltpu

_EPS = 0.3
_LANES = 128


def _nll_kernel(pred_ref, target_ref, var_ref, out_ref, *, scale):
    pred = pred_ref[...]
    target = target_ref[...]
    bbox_var = jax.nn.sigmoid(var_ref[...])
    z = (target - pred) / bbox_var
    prob = jnp.exp(-0.5 * z * z) * scale / (bbox_var + _EPS)
    out_ref[...] = prob.astype(out_ref.dtype)


def _nll_kernel_weighted(pred_ref, target_ref, var_ref, weight_ref, out_ref,
                         *, scale):
    pred = pred_ref[...]
    target = target_ref[...]
    bbox_var = jax.nn.sigmoid(var_ref[...])
    z = (target - pred) / bbox_var
    prob = jnp.exp(-0.5 * z * z) * scale / (bbox_var + _EPS)
    out_ref[...] = (prob * weight_ref[...]).astype(out_ref.dtype)


def _round_up(x, m):
    return (x + m - 1) // m * m


def nll_loss(pred, target, var, weight=None, *, loss_weight=1.0,
             block_rows=2048):
    """Pallas implementation of NLLLoss.forward (reduction='none')."""
    assert pred.shape == target.shape == var.shape
    if weight is not None:
        assert weight.shape == pred.shape

    orig_shape = pred.shape
    dtype = pred.dtype
    total = pred.size

    # --- Lane-dense layout plumbing (pure reshape/pad; math is elementwise) ---
    rows = _round_up(pl.cdiv(total, _LANES), 8)        # >= 8 sublanes
    block_rows = max(8, min(_round_up(int(block_rows), 8), rows))
    rows = _round_up(rows, block_rows)                 # grid divides evenly
    padded = rows * _LANES

    def to_slab(x):
        flat = x.reshape(-1)
        if padded != total:
            # Zero padding is numerically safe: sigmoid(0)=0.5, no div-by-zero.
            flat = jnp.pad(flat, (0, padded - total))
        return flat.reshape(rows, _LANES)

    inputs = [to_slab(pred), to_slab(target), to_slab(var)]
    if weight is not None:
        inputs.append(to_slab(weight))

    spec = pl.BlockSpec((block_rows, _LANES), lambda i: (i, 0))
    grid = (rows // block_rows,)

    scale = float(loss_weight) / math.sqrt(2.0 * math.pi)
    kernel = functools.partial(
        _nll_kernel_weighted if weight is not None else _nll_kernel,
        scale=scale)

    out = pl.pallas_call(
        kernel,
        out_shape=jax.ShapeDtypeStruct((rows, _LANES), dtype),
        grid_spec=pltpu.PrefetchScalarGridSpec(
            num_scalar_prefetch=0,
            grid=grid,
            in_specs=[spec] * len(inputs),
            out_specs=spec,
        ),
        compiler_params=pltpu.CompilerParams(
            dimension_semantics=("parallel",)),
    )(*inputs)

    return out.reshape(-1)[:total].reshape(orig_shape)


def nll_loss_ref(pred, target, var, weight=None, *, loss_weight=1.0):
    """Pure-JAX reference matching the PyTorch code exactly."""
    bbox_var = jax.nn.sigmoid(var)
    z = (target - pred) / bbox_var
    prob = jnp.exp(-(z ** 2) / 2.0) / math.sqrt(2.0 * math.pi) / (bbox_var + _EPS)
    loss = loss_weight * prob
    if weight is not None:
        loss = loss * weight
    return loss


if __name__ == "__main__":
    key = jax.random.PRNGKey(0)
    k1, k2, k3, k4 = jax.random.split(key, 4)

    num_boxes, box_dim = 128, 4  # bbox-regression layout (N, 4)
    pred = jax.random.normal(k1, (num_boxes, box_dim), dtype=jnp.float32)
    target = jax.random.normal(k2, (num_boxes, box_dim), dtype=jnp.float32)
    var = jax.random.normal(k3, (num_boxes, box_dim), dtype=jnp.float32)
    weight = jax.random.uniform(k4, (num_boxes, box_dim), dtype=jnp.float32)

    loss_weight = 1.0  # module "parameter" from __init__

    # Weighted path.
    out_w = nll_loss(pred, target, var, weight, loss_weight=loss_weight)
    jax.block_until_ready(out_w)
    ref_w = nll_loss_ref(pred, target, var, weight, loss_weight=loss_weight)
    assert out_w.shape == ref_w.shape and out_w.dtype == ref_w.dtype
    assert jnp.allclose(out_w, ref_w, rtol=1e-5, atol=1e-6), "weighted mismatch"

    # Unweighted path (no dummy ones stream is DMA'd).
    out_nw = nll_loss(pred, target, var, None, loss_weight=loss_weight)
    jax.block_until_ready(out_nw)
    ref_nw = nll_loss_ref(pred, target, var, None, loss_weight=loss_weight)
    assert out_nw.shape == ref_nw.shape and out_nw.dtype == ref_nw.dtype
    assert jnp.allclose(out_nw, ref_nw, rtol=1e-5, atol=1e-6), "unweighted mismatch"

    print("KERNEL_OK")
</pallas_src>

<mosaic_0001>
module attributes {stable_mosaic.version = 11 : i64} {
  func.func @_nll_kernel_weighted(%arg0: i32, %arg1: memref<8x128xf32, #tpu.memory_space<vmem>>, %arg2: memref<8x128xf32, #tpu.memory_space<vmem>>, %arg3: memref<8x128xf32, #tpu.memory_space<vmem>>, %arg4: memref<8x128xf32, #tpu.memory_space<vmem>>, %arg5: memref<8x128xf32, #tpu.memory_space<vmem>>) attributes {dimension_semantics = [#tpu.dimension_semantics<parallel>], iteration_bounds = array<i64: 1>, scalar_prefetch = 0 : i64, scratch_operands = 0 : i64, tpu.core_type = #tpu.core_type<tc>, window_params = [{transform_indices = @transform_0, window_bounds = array<i64: 8, 128>}, {transform_indices = @transform_1, window_bounds = array<i64: 8, 128>}, {transform_indices = @transform_2, window_bounds = array<i64: 8, 128>}, {transform_indices = @transform_3, window_bounds = array<i64: 8, 128>}, {transform_indices = @transform_4, window_bounds = array<i64: 8, 128>}]} {
    %c0 = arith.constant 0 : index
    %c0_0 = arith.constant 0 : index
    %0 = vector.load %arg1[%c0, %c0_0] : memref<8x128xf32, #tpu.memory_space<vmem>>, vector<8x128xf32>
    %c0_1 = arith.constant 0 : index
    %c0_2 = arith.constant 0 : index
    %1 = vector.load %arg2[%c0_1, %c0_2] : memref<8x128xf32, #tpu.memory_space<vmem>>, vector<8x128xf32>
    %c0_3 = arith.constant 0 : index
    %c0_4 = arith.constant 0 : index
    %2 = vector.load %arg3[%c0_3, %c0_4] : memref<8x128xf32, #tpu.memory_space<vmem>>, vector<8x128xf32>
    %3 = arith.negf %2 : vector<8x128xf32>
    %4 = math.exp %3 : vector<8x128xf32>
    %cst = arith.constant 1.000000e+00 : f32
    %5 = vector.broadcast %cst : f32 to vector<8x128xf32>
    %6 = arith.addf %5, %4 : vector<8x128xf32>
    %7 = arith.divf %5, %6 : vector<8x128xf32>
    %8 = arith.subf %1, %0 : vector<8x128xf32>
    %9 = arith.divf %8, %7 : vector<8x128xf32>
    %cst_5 = arith.constant -5.000000e-01 : f32
    %10 = vector.broadcast %cst_5 : f32 to vector<8x128xf32>
    %11 = arith.mulf %10, %9 : vector<8x128xf32>
    %12 = arith.mulf %11, %9 : vector<8x128xf32>
    %13 = math.exp %12 : vector<8x128xf32>
    %cst_6 = arith.constant 0.398942292 : f32
    %14 = vector.broadcast %cst_6 : f32 to vector<8x128xf32>
    %15 = arith.mulf %13, %14 : vector<8x128xf32>
    %cst_7 = arith.constant 3.000000e-01 : f32
    %16 = vector.broadcast %cst_7 : f32 to vector<8x128xf32>
    %17 = arith.addf %7, %16 : vector<8x128xf32>
    %18 = arith.divf %15, %17 : vector<8x128xf32>
    %c0_8 = arith.constant 0 : index
    %c0_9 = arith.constant 0 : index
    %19 = vector.load %arg4[%c0_8, %c0_9] : memref<8x128xf32, #tpu.memory_space<vmem>>, vector<8x128xf32>
    %20 = arith.mulf %18, %19 : vector<8x128xf32>
    %c0_10 = arith.constant 0 : index
    %c0_11 = arith.constant 0 : index
    %21 = vector.load %arg5[%c0_10, %c0_11] : memref<8x128xf32, #tpu.memory_space<vmem>>, vector<8x128xf32>
    tpu.vector_store %arg5[%c0_10, %c0_11], %20 {strides = array<i32>} : memref<8x128xf32, #tpu.memory_space<vmem>>, vector<8x128xf32>,
    return
  }
  func.func @transform_0(%arg0: i32) -> (i32, i32) {
    %c0_i32 = arith.constant 0 : i32
    %c0_i32_0 = arith.constant 0 : i32
    return %arg0, %c0_i32 : i32, i32
  }
  func.func @transform_1(%arg0: i32) -> (i32, i32) {
    %c0_i32 = arith.constant 0 : i32
    %c0_i32_0 = arith.constant 0 : i32
    return %arg0, %c0_i32 : i32, i32
  }
  func.func @transform_2(%arg0: i32) -> (i32, i32) {
    %c0_i32 = arith.constant 0 : i32
    %c0_i32_0 = arith.constant 0 : i32
    return %arg0, %c0_i32 : i32, i32
  }
  func.func @transform_3(%arg0: i32) -> (i32, i32) {
    %c0_i32 = arith.constant 0 : i32
    %c0_i32_0 = arith.constant 0 : i32
    return %arg0, %c0_i32 : i32, i32
  }
  func.func @transform_4(%arg0: i32) -> (i32, i32) {
    %c0_i32 = arith.constant 0 : i32
    %c0_i32_0 = arith.constant 0 : i32
    return %arg0, %c0_i32 : i32, i32
  }
}

</mosaic_0001>

<llo_original>
// kernel: tpu_custom_call.1
$region0: #{tpu_custom_call.1}
  #allocation0 [shape = 'u32[]', space=smem, size = 0x4, offset = 0x4, fixed_abs, tag = 'smem constant byte address 0x4 - core index']
  #allocation1 [shape = 'u32[144,128]{1,0:T(1,128)}', space=vmem, size = 0x12000, scoped, tag = 'internal scratch']
  %s0 = inlined_call_operand.hbm [shape: f32[8,128], index: 0, kind: input, shape index: {}]
  %s1 = inlined_call_operand.hbm [shape: f32[8,128], index: 1, kind: input, shape index: {}]
  %s2 = inlined_call_operand.hbm [shape: f32[8,128], index: 2, kind: input, shape index: {}]
  %s3 = inlined_call_operand.hbm [shape: f32[8,128], index: 3, kind: input, shape index: {}]
  %s4 = inlined_call_operand.hbm [shape: f32[8,128], index: 4, kind: output, shape index: {}]
  %s5 = sld [smem:[#allocation0]]
  $region42: #{tpu_custom_call.1} parent=0
    _
  %s7 = ssub.s32 1, %s5
  %s8 = scalar_select 0, %s7, %s5
  $region1: #{tpu_custom_call.1} parent=0
    #allocation2 [shape = 'u8[4096]{0}', space=vmem, size = 0x1000, scoped, tag = 'input window, operand 0, single buffered']
    #allocation3 [shape = 's32[1]{0}', space=sflag, size = 0x4, scoped, tag = 'scoped memory for tpu_custom_call.1']
    #allocation4 [shape = 's32[1]{0}', space=sflag, size = 0x4, scoped, tag = 'scoped memory for tpu_custom_call.1']
    #allocation5 [shape = 'u8[4096]{0}', space=vmem, size = 0x1000, scoped, tag = 'input window, operand 1, single buffered']
    #allocation6 [shape = 's32[1]{0}', space=sflag, size = 0x4, scoped, tag = 'scoped memory for tpu_custom_call.1']
    #allocation7 [shape = 'u8[4096]{0}', space=vmem, size = 0x1000, scoped, tag = 'input window, operand 2, single buffered']
    #allocation8 [shape = 'u8[4096]{0}', space=vmem, size = 0x1000, scoped, tag = 'input window, operand 3, single buffered']
    #allocation9 [shape = 's32[1]{0}', space=sflag, size = 0x4, scoped, tag = 'scoped memory for tpu_custom_call.1']
    #allocation10 [shape = 'u8[4096]{0}', space=vmem, size = 0x1000, scoped, tag = 'output window, operand 0, single buffered']
    %9 = vsyncpa [#allocation3], 0
    %10 = vsyncpa [#allocation6], 0
    %11 = vsyncpa [#allocation9], 0
    %12 = vsyncpa [#allocation4], 0
    // Predicated region
    $region2: #{tpu_custom_call.1} parent=1 // pred_check
      _
    $region3: #{tpu_custom_call.1} parent=1 // pred_check_branch
      %14 = sbr.rel (0) target = $region5
    $region4: #{tpu_custom_call.1} parent=1 // pred_region
      %s16 = ssub.s32 128, 128
      %17 = vsyncadd [#allocation3], %s16
      %s19 = sshll.u32 [#allocation2], 4
      %s20 = int_to_ptr.vmem [resolvable:$true] %s19
      %22 = dma.hbm_to_vmem [thread:$0]  %s0, 128, %s20, [#allocation3]
    $region5: #{tpu_custom_call.1} parent=1 // pred_fallthru
      _
    // Predicated region
    $region6: #{tpu_custom_call.1} parent=1 // pred_check
      _
    $region7: #{tpu_custom_call.1} parent=1 // pred_check_branch
      %24 = sbr.rel (0) target = $region9
    $region8: #{tpu_custom_call.1} parent=1 // pred_region
      %s26 = ssub.s32 128, 128
      %27 = vsyncadd [#allocation6], %s26
      %s29 = sshll.u32 [#allocation5], 4
      %s30 = int_to_ptr.vmem [resolvable:$true] %s29
      %32 = dma.hbm_to_vmem [thread:$0]  %s1, 128, %s30, [#allocation6]
    $region9: #{tpu_custom_call.1} parent=1 // pred_fallthru
      _
    // Predicated region
    $region10: #{tpu_custom_call.1} parent=1 // pred_check
      _
    $region11: #{tpu_custom_call.1} parent=1 // pred_check_branch
      %34 = sbr.rel (0) target = $region13
    $region12: #{tpu_custom_call.1} parent=1 // pred_region
      %s36 = ssub.s32 128, 128
      %37 = vsyncadd [#allocation6], %s36
      %s39 = sshll.u32 [#allocation7], 4
      %s40 = int_to_ptr.vmem [resolvable:$true] %s39
      %42 = dma.hbm_to_vmem [thread:$0]  %s2, 128, %s40, [#allocation6]
    $region13: #{tpu_custom_call.1} parent=1 // pred_fallthru
      _
    // Predicated region
    $region14: #{tpu_custom_call.1} parent=1 // pred_check
      _
    $region15: #{tpu_custom_call.1} parent=1 // pred_check_branch
      %44 = sbr.rel (0) target = $region17
    $region16: #{tpu_custom_call.1} parent=1 // pred_region
      %s46 = ssub.s32 128, 128
      %47 = vsyncadd [#allocation9], %s46
      %s49 = sshll.u32 [#allocation8], 4
      %s50 = int_to_ptr.vmem [resolvable:$true] %s49
      %52 = dma.hbm_to_vmem [thread:$0]  %s3, 128, %s50, [#allocation9]
    $region17: #{tpu_custom_call.1} parent=1 // pred_fallthru
      _
    // Predicated region
    $region18: #{tpu_custom_call.1} parent=1 // pred_check
      _
    $region19: #{tpu_custom_call.1} parent=1 // pred_check_branch
      %54 = sbr.rel (0) target = $region21
    $region20: #{tpu_custom_call.1} parent=1 // pred_region
      %55 = dma.done [#allocation3], 128
    $region21: #{tpu_custom_call.1} parent=1 // pred_fallthru
      _
    // Predicated region
    $region22: #{tpu_custom_call.1} parent=1 // pred_check
      _
    $region23: #{tpu_custom_call.1} parent=1 // pred_check_branch
      %57 = sbr.rel (0) target = $region25
    $region24: #{tpu_custom_call.1} parent=1 // pred_region
      %58 = dma.done [#allocation6], 128
    $region25: #{tpu_custom_call.1} parent=1 // pred_fallthru
      _
    // Predicated region
    $region26: #{tpu_custom_call.1} parent=1 // pred_check
      _
    $region27: #{tpu_custom_call.1} parent=1 // pred_check_branch
      %60 = sbr.rel (0) target = $region29
    $region28: #{tpu_custom_call.1} parent=1 // pred_region
      %61 = dma.done [#allocation6], 128
    $region29: #{tpu_custom_call.1} parent=1 // pred_fallthru
      _
    // Predicated region
    $region30: #{tpu_custom_call.1} parent=1 // pred_check
      _
    $region31: #{tpu_custom_call.1} parent=1 // pred_check_branch
      %63 = sbr.rel (0) target = $region33
    $region32: #{tpu_custom_call.1} parent=1 // pred_region
      %64 = dma.done [#allocation9], 128
    $region33: #{tpu_custom_call.1} parent=1 // pred_fallthru
      _
    %v65 = vld [vmem:[#allocation2] sm:$0xff]
    %v66 = vld [vmem:[#allocation5] sm:$0xff]
    %v67 = vld [vmem:[#allocation7] sm:$0xff]
    %v68 = vxor.u32 %v67, 2147483648
    %v69 = vmul.f32 %v68, 1.442695
    %v70 = vpow.pop %v69
    %v71 = vadd.f32 %v70, 1.0
    %v72 = vrcp.pop %v71
    %v73 = vmul.f32 1.0, %v72
    %v74 = vsub.f32 %v66, %v65
    %v75 = vrcp.pop %v73
    %v76 = vmul.f32 %v74, %v75
    %v77 = vmul.f32 %v76, -0.5
    %v78 = vmul.f32 %v77, %v76
    %v79 = vmul.f32 %v78, 1.442695
    %v80 = vpow.pop %v79
    %v81 = vmul.f32 %v80, 0.3989423
    %v82 = vadd.f32 %v73, 0.3
    %v83 = vrcp.pop %v82
    %v84 = vmul.f32 %v81, %v83
    %v85 = vld [vmem:[#allocation8] sm:$0xff]
    %v86 = vmul.f32 %v84, %v85
    %87 = vst [vmem:[#allocation10] sm:$0xff] %v86
    // Predicated region
    $region34: #{tpu_custom_call.1} parent=1 // pred_check
      _
    $region35: #{tpu_custom_call.1} parent=1 // pred_check_branch
      %89 = sbr.rel (0) target = $region37
    $region36: #{tpu_custom_call.1} parent=1 // pred_region
      %s91 = ssub.s32 128, 128
      %92 = vsyncadd [#allocation4], %s91
      %s94 = sshll.u32 [#allocation10], 4
      %s95 = int_to_ptr.vmem [resolvable:$true] %s94
      %97 = dma.vmem_to_hbm [thread:$0]  %s95, 128, %s4, [#allocation4]
    $region37: #{tpu_custom_call.1} parent=1 // pred_fallthru
      _
    // Predicated region
    $region38: #{tpu_custom_call.1} parent=1 // pred_check
      _
    $region39: #{tpu_custom_call.1} parent=1 // pred_check_branch
      %99 = sbr.rel (0) target = $region41
    $region40: #{tpu_custom_call.1} parent=1 // pred_region
      %100 = dma.done [#allocation4], 128
    $region41: #{tpu_custom_call.1} parent=1 // pred_fallthru
      _
    %101 = vsyncpa [#allocation3], 1
    %102 = vsyncpa [#allocation6], 1
    %103 = vsyncpa [#allocation9], 1
    %104 = vsyncpa [#allocation4], 1

</llo_original>
